<compile_context>
chip_gen: v7x
topology: tpu7x:2x2x1
jax: 0.10.0
libtpu: 0.0.40
codegen_flags: <defaults>
</compile_context>

<pallas_src>
import functools

import jax
import jax.numpy as jnp
from jax.experimental import pallas as pl
from jax.experimental.pallas import tpu as pltpu


def _round_up(x, m):
    return ((x + m - 1) // m) * m


def _pick_batch_tile(b, h, o_pad, budget_bytes=24 << 20):
    """Largest row tile (multiple of 8, <=1024) whose working set fits the budget."""
    row_cap = _round_up(max(b, 1), 8)
    for cand in (1024, 512, 256, 128, 64, 32, 16, 8):
        if cand > row_cap:
            continue
        need = 4 * (2 * cand * h          # embedding tile, double-buffered
                    + 2 * o_pad * h       # resident weight (buffered)
                    + 4 * cand * o_pad    # labels in + preds out, double-buffered
                    + 2 * o_pad           # bias
                    + 2 * 8 * 128)        # loss partial tile
        if need <= budget_bytes:
            return cand
    return 8


def _linear_bce_kernel(emb_ref, w_ref, b_ref, lab_ref, preds_ref, part_ref,
                       *, n_rows, n_cols):
    """One batch tile: linear layer (MXU) + masked, numerically-stable BCE."""
    x = emb_ref[...]                               # [tm, H]
    w = w_ref[...]                                 # [O_pad, H]  (torch layout)
    b = b_ref[...].astype(jnp.float32)             # [1, O_pad]
    y = lab_ref[...].astype(jnp.float32)           # [tm, O_pad]

    # Contract the hidden axis directly against the [O, H] weight: the MXU
    # handles the transposed contraction natively (no wrapper transpose).
    logits = jax.lax.dot_general(
        x, w,
        dimension_numbers=(((1,), (1,)), ((), ())),
        preferred_element_type=jnp.float32) + b    # [tm, O_pad]
    preds_ref[...] = logits.astype(preds_ref.dtype)

    tm, o_pad = logits.shape
    row0 = pl.program_id(0) * tm
    rows = row0 + jax.lax.broadcasted_iota(jnp.int32, (tm, o_pad), 0)
    cols = jax.lax.broadcasted_iota(jnp.int32, (tm, o_pad), 1)
    valid = (rows < n_rows) & (cols < n_cols)      # mask padded rows/columns

    # BCEWithLogitsLoss (stable): max(z,0) - z*y + log1p(exp(-|z|))
    per_elem = (jnp.maximum(logits, 0.0)
                - logits * y
                + jnp.log1p(jnp.exp(-jnp.abs(logits))))
    partial = jnp.sum(jnp.where(valid, per_elem, 0.0))

    # Lane-dense per-step partial sum; no cross-step carried state (keeps the
    # batch grid axis safely "parallel").
    part_ref[...] = jnp.full(part_ref.shape, partial, dtype=part_ref.dtype)


def linear_classifier_forward(embedding, labels, weight, bias):
    """Pallas wrapper.

    embedding: [B, H] float32
    labels:    [B, O] float32
    weight:    [O, H] float32  (torch nn.Linear convention)
    bias:      [O]    float32
    Returns (loss scalar, preds [B, O]).
    """
    B, H = embedding.shape
    O = weight.shape[0]

    O_pad = _round_up(O, 128)                      # lane-dense output width
    tm = _pick_batch_tile(B, H, O_pad)
    B_pad = _round_up(B, tm)
    G = B_pad // tm

    # Zero-pad to padded shapes (padded rows/cols are masked out of the loss).
    emb_p = embedding if B_pad == B else jnp.pad(embedding, ((0, B_pad - B), (0, 0)))
    lab_p = labels
    if B_pad != B or O_pad != O:
        lab_p = jnp.pad(labels, ((0, B_pad - B), (0, O_pad - O)))
    w_p = weight if O_pad == O else jnp.pad(weight, ((0, O_pad - O), (0, 0)))
    b_p = (bias if O_pad == O else jnp.pad(bias, (0, O_pad - O))).reshape(1, O_pad)

    # Explicit VMEM limit with headroom (sized for v7x's smaller VMEM too).
    need = 4 * (2 * tm * H + 2 * O_pad * H + 4 * tm * O_pad + 2 * O_pad + 2 * 8 * 128)
    vmem_limit = int(min(32 << 20, max(4 << 20, 2 * need)))

    preds_p, partials = pl.pallas_call(
        functools.partial(_linear_bce_kernel, n_rows=B, n_cols=O),
        out_shape=(
            jax.ShapeDtypeStruct((B_pad, O_pad), jnp.float32),
            jax.ShapeDtypeStruct((G, 8, 128), jnp.float32),
        ),
        grid=(G,),
        in_specs=[
            pl.BlockSpec((tm, H), lambda i: (i, 0)),        # embedding tile
            pl.BlockSpec((O_pad, H), lambda i: (0, 0)),     # weight, resident
            pl.BlockSpec((1, O_pad), lambda i: (0, 0)),     # bias, resident
            pl.BlockSpec((tm, O_pad), lambda i: (i, 0)),    # labels tile
        ],
        out_specs=(
            pl.BlockSpec((tm, O_pad), lambda i: (i, 0)),    # preds tile (lane-dense)
            pl.BlockSpec((1, 8, 128), lambda i: (i, 0, 0)),  # per-step loss partial
        ),
        compiler_params=pltpu.CompilerParams(
            dimension_semantics=("parallel",),
            vmem_limit_bytes=vmem_limit,
        ),
    )(emb_p, w_p, b_p, lab_p)

    loss = jnp.sum(partials[:, 0, 0]) / jnp.float32(B * O)   # global mean
    preds = preds_p[:B, :O]
    return loss, preds


def _reference(embedding, labels, weight, bias):
    """Pure-JAX reference for correctness check."""
    logits = embedding @ weight.T + bias
    per = (jnp.maximum(logits, 0.0)
           - logits * labels
           + jnp.log1p(jnp.exp(-jnp.abs(logits))))
    return jnp.mean(per), logits


if __name__ == "__main__":
    key = jax.random.PRNGKey(0)
    k_emb, k_lab, k_w, k_b = jax.random.split(key, 4)

    batch, hidden_dim, output_dim = 8, 32, 8

    embedding = jax.random.normal(k_emb, (batch, hidden_dim), dtype=jnp.float32)
    labels = jax.random.bernoulli(k_lab, 0.5, (batch, output_dim)).astype(jnp.float32)

    # Deterministic parameter init (uniform, torch-Linear-like bound 1/sqrt(H))
    bound = 1.0 / jnp.sqrt(jnp.float32(hidden_dim))
    weight = jax.random.uniform(k_w, (output_dim, hidden_dim),
                                minval=-bound, maxval=bound, dtype=jnp.float32)
    bias = jax.random.uniform(k_b, (output_dim,),
                              minval=-bound, maxval=bound, dtype=jnp.float32)

    loss, preds = linear_classifier_forward(embedding, labels, weight, bias)
    jax.block_until_ready((loss, preds))

    ref_loss, ref_preds = _reference(embedding, labels, weight, bias)
    assert jnp.allclose(preds, ref_preds, atol=1e-5, rtol=1e-5)
    assert jnp.allclose(loss, ref_loss, atol=1e-5, rtol=1e-5)

    print("KERNEL_OK")
</pallas_src>

<mosaic_0001>
module attributes {stable_mosaic.version = 11 : i64} {
  func.func @_linear_bce_kernel(%arg0: i32, %arg1: memref<8x32xf32, #tpu.memory_space<vmem>>, %arg2: memref<128x32xf32, #tpu.memory_space<vmem>>, %arg3: memref<1x128xf32, #tpu.memory_space<vmem>>, %arg4: memref<8x128xf32, #tpu.memory_space<vmem>>, %arg5: memref<8x128xf32, #tpu.memory_space<vmem>>, %arg6: memref<1x8x128xf32, #tpu.memory_space<vmem>>) attributes {dimension_semantics = [#tpu.dimension_semantics<parallel>], iteration_bounds = array<i64: 1>, scalar_prefetch = 0 : i64, scratch_operands = 0 : i64, tpu.core_type = #tpu.core_type<tc>, window_params = [{transform_indices = @transform_0, window_bounds = array<i64: 8, 32>}, {pipeline_mode = #tpu.pipeline_mode<synchronous>, transform_indices = @transform_1, window_bounds = array<i64: 128, 32>}, {pipeline_mode = #tpu.pipeline_mode<synchronous>, transform_indices = @transform_2, window_bounds = array<i64: 1, 128>}, {transform_indices = @transform_3, window_bounds = array<i64: 8, 128>}, {transform_indices = @transform_4, window_bounds = array<i64: 8, 128>}, {transform_indices = @transform_5, window_bounds = array<i64: 1, 8, 128>}]} {
    %c0 = arith.constant 0 : index
    %c0_0 = arith.constant 0 : index
    %0 = vector.load %arg1[%c0, %c0_0] : memref<8x32xf32, #tpu.memory_space<vmem>>, vector<8x32xf32>
    %c0_1 = arith.constant 0 : index
    %c0_2 = arith.constant 0 : index
    %1 = vector.load %arg2[%c0_1, %c0_2] : memref<128x32xf32, #tpu.memory_space<vmem>>, vector<128x32xf32>
    %c0_3 = arith.constant 0 : index
    %c0_4 = arith.constant 0 : index
    %2 = vector.load %arg3[%c0_3, %c0_4] : memref<1x128xf32, #tpu.memory_space<vmem>>, vector<1x128xf32>
    %c0_5 = arith.constant 0 : index
    %c0_6 = arith.constant 0 : index
    %3 = vector.load %arg4[%c0_5, %c0_6] : memref<8x128xf32, #tpu.memory_space<vmem>>, vector<8x128xf32>
    %cst = arith.constant dense<0.000000e+00> : vector<8x128xf32>
    %4 = tpu.matmul %0, %1, %cst {dimension_numbers = #tpu.dot_dimension_numbers<[1], [1], [0], [0], [0, 0, 1, 0], [], []>} : vector<8x32xf32>, vector<128x32xf32>, vector<8x128xf32> -> vector<8x128xf32>
    %5 = vector.broadcast %2 : vector<1x128xf32> to vector<8x128xf32>
    %6 = arith.addf %4, %5 : vector<8x128xf32>
    %c0_7 = arith.constant 0 : index
    %c0_8 = arith.constant 0 : index
    %7 = vector.load %arg5[%c0_7, %c0_8] : memref<8x128xf32, #tpu.memory_space<vmem>>, vector<8x128xf32>
    tpu.vector_store %arg5[%c0_7, %c0_8], %6 {strides = array<i32>} : memref<8x128xf32, #tpu.memory_space<vmem>>, vector<8x128xf32>,
    %c8_i32 = arith.constant 8 : i32
    %8 = arith.muli %arg0, %c8_i32 : i32
    %9 = tpu.iota {dimensions = array<i32: 0>} : vector<8x128xi32>
    %10 = vector.broadcast %8 : i32 to vector<8x128xi32>
    %11 = arith.addi %10, %9 : vector<8x128xi32>
    %12 = tpu.iota {dimensions = array<i32: 1>} : vector<8x128xi32>
    %c8_i32_9 = arith.constant 8 : i32
    %13 = vector.broadcast %c8_i32_9 : i32 to vector<8x128xi32>
    %14 = arith.cmpi slt, %11, %13 : vector<8x128xi32>
    %c8_i32_10 = arith.constant 8 : i32
    %15 = vector.broadcast %c8_i32_10 : i32 to vector<8x128xi32>
    %16 = arith.cmpi slt, %12, %15 : vector<8x128xi32>
    %17 = arith.andi %14, %16 : vector<8x128xi1>
    %cst_11 = arith.constant 0.000000e+00 : f32
    %18 = vector.broadcast %cst_11 : f32 to vector<8x128xf32>
    %19 = arith.maximumf %6, %18 : vector<8x128xf32>
    %20 = arith.mulf %6, %3 : vector<8x128xf32>
    %21 = arith.subf %19, %20 : vector<8x128xf32>
    %22 = math.absf %6 : vector<8x128xf32>
    %cst_12 = arith.constant 0.000000e+00 : f32
    %23 = vector.broadcast %cst_12 : f32 to vector<8x128xf32>
    %24 = arith.subf %23, %22 : vector<8x128xf32>
    %25 = math.exp %24 : vector<8x128xf32>
    %26 = math.log1p %25 : vector<8x128xf32>
    %27 = arith.addf %21, %26 : vector<8x128xf32>
    %cst_13 = arith.constant 0.000000e+00 : f32
    %28 = vector.broadcast %cst_13 : f32 to vector<8x128xf32>
    %29 = arith.select %17, %27, %28 : vector<8x128xi1>, vector<8x128xf32>
    %30 = vector.shape_cast %29 : vector<8x128xf32> to vector<1x8x128xf32>
    %cst_14 = arith.constant dense<0.000000e+00> : vector<1xf32>
    %31 = vector.multi_reduction <add>, %30, %cst_14 [1, 2] : vector<1x8x128xf32> to vector<1xf32>
    %32 = vector.shape_cast %31 : vector<1xf32> to vector<1x1x1xf32>
    %33 = vector.extract %32[0, 0, 0] : f32 from vector<1x1x1xf32>
    %34 = vector.broadcast %33 : f32 to vector<1x8x128xf32>
    %c0_15 = arith.constant 0 : index
    %c0_16 = arith.constant 0 : index
    %c0_17 = arith.constant 0 : index
    %35 = vector.load %arg6[%c0_15, %c0_16, %c0_17] : memref<1x8x128xf32, #tpu.memory_space<vmem>>, vector<1x8x128xf32>
    tpu.vector_store %arg6[%c0_15, %c0_16, %c0_17], %34 {strides = array<i32>} : memref<1x8x128xf32, #tpu.memory_space<vmem>>, vector<1x8x128xf32>,
    return
  }
  func.func @transform_0(%arg0: i32) -> (i32, i32) {
    %c0_i32 = arith.constant 0 : i32
    %c0_i32_0 = arith.constant 0 : i32
    return %arg0, %c0_i32 : i32, i32
  }
  func.func @transform_1(%arg0: i32) -> (i32, i32) {
    %c0_i32 = arith.constant 0 : i32
    %c0_i32_0 = arith.constant 0 : i32
    %c0_i32_1 = arith.constant 0 : i32
    return %c0_i32, %c0_i32_0 : i32, i32
  }
  func.func @transform_2(%arg0: i32) -> (i32, i32) {
    %c0_i32 = arith.constant 0 : i32
    %c0_i32_0 = arith.constant 0 : i32
    %c0_i32_1 = arith.constant 0 : i32
    return %c0_i32, %c0_i32_0 : i32, i32
  }
  func.func @transform_3(%arg0: i32) -> (i32, i32) {
    %c0_i32 = arith.constant 0 : i32
    %c0_i32_0 = arith.constant 0 : i32
    return %arg0, %c0_i32 : i32, i32
  }
  func.func @transform_4(%arg0: i32) -> (i32, i32) {
    %c0_i32 = arith.constant 0 : i32
    %c0_i32_0 = arith.constant 0 : i32
    return %arg0, %c0_i32 : i32, i32
  }
  func.func @transform_5(%arg0: i32) -> (i32, i32, i32) {
    %c0_i32 = arith.constant 0 : i32
    %c0_i32_0 = arith.constant 0 : i32
    %c0_i32_1 = arith.constant 0 : i32
    return %arg0, %c0_i32, %c0_i32_0 : i32, i32, i32
  }
}

</mosaic_0001>

<llo_original>
// kernel: tpu_custom_call.1
$region0: #{tpu_custom_call.1}
  #allocation0 [shape = 'u32[]', space=smem, size = 0x4, offset = 0x4, fixed_abs, tag = 'smem constant byte address 0x4 - core index']
  #allocation1 [shape = 'u32[144,128]{1,0:T(1,128)}', space=vmem, size = 0x12000, scoped, tag = 'internal scratch']
  %s0 = inlined_call_operand.vmem [shape: f32[8,32], index: 0, kind: input, shape index: {}]
  %s1 = inlined_call_operand.vmem [shape: f32[128,32], index: 1, kind: input, shape index: {}]
  %s2 = inlined_call_operand.vmem [shape: f32[1,128], index: 2, kind: input, shape index: {}]
  %s3 = inlined_call_operand.vmem [shape: f32[8,128], index: 3, kind: input, shape index: {}]
  %s4 = inlined_call_operand.hbm [shape: f32[8,128], index: 4, kind: output, shape index: {0}]
  %s5 = inlined_call_operand.hbm [shape: f32[1,8,128], index: 5, kind: output, shape index: {1}]
  %6 = xla_tuple %s4, %s5
  %s7 = sld [smem:[#allocation0]]
  $region34: #{tpu_custom_call.1} parent=0
    _
  %s9 = ssub.s32 1, %s7
  %s10 = scalar_select 0, %s9, %s7
  $region1: #{tpu_custom_call.1} parent=0
    #allocation2 [shape = 'u8[4096]{0}', space=vmem, size = 0x1000, scoped, tag = 'output window, operand 0, single buffered']
    #allocation3 [shape = 's32[1]{0}', space=sflag, size = 0x4, scoped, tag = 'scoped memory for tpu_custom_call.1']
    #allocation4 [shape = 'u8[4096]{0}', space=vmem, size = 0x1000, scoped, tag = 'output window, operand 1, single buffered']
    #allocation5 [shape = 's32[1]{0}', space=sflag, size = 0x4, scoped, tag = 'scoped memory for tpu_custom_call.1']
    %11 = vsyncpa [#allocation3], 0
    %12 = vsyncpa [#allocation5], 0
    // Predicated region
    $region2: #{tpu_custom_call.1} parent=1 // pred_check
      _
    $region3: #{tpu_custom_call.1} parent=1 // pred_check_branch
      %14 = sbr.rel (0) target = $region5
    $region4: #{tpu_custom_call.1} parent=1 // pred_region
      _
    $region5: #{tpu_custom_call.1} parent=1 // pred_fallthru
      _
    // Predicated region
    $region6: #{tpu_custom_call.1} parent=1 // pred_check
      _
    $region7: #{tpu_custom_call.1} parent=1 // pred_check_branch
      %16 = sbr.rel (0) target = $region9
    $region8: #{tpu_custom_call.1} parent=1 // pred_region
      _
    $region9: #{tpu_custom_call.1} parent=1 // pred_fallthru
      _
    // Predicated region
    $region10: #{tpu_custom_call.1} parent=1 // pred_check
      _
    $region11: #{tpu_custom_call.1} parent=1 // pred_check_branch
      %18 = sbr.rel (0) target = $region13
    $region12: #{tpu_custom_call.1} parent=1 // pred_region
      _
    $region13: #{tpu_custom_call.1} parent=1 // pred_fallthru
      _
    // Predicated region
    $region14: #{tpu_custom_call.1} parent=1 // pred_check
      _
    $region15: #{tpu_custom_call.1} parent=1 // pred_check_branch
      %20 = sbr.rel (0) target = $region17
    $region16: #{tpu_custom_call.1} parent=1 // pred_region
      _
    $region17: #{tpu_custom_call.1} parent=1 // pred_fallthru
      _
    %v21 = vld [vmem:[%s0] sm:$0xff]
    %v22 = vld [vmem:[%s1] sm:$0xff]
    %v23 = vld [vmem:[%s1 + $0x8] sm:$0xff]
    %v24 = vld [vmem:[%s1 + $0x10] sm:$0xff]
    %v25 = vld [vmem:[%s1 + $0x18] sm:$0xff]
    %v26 = vld [vmem:[%s1 + $0x20] sm:$0xff]
    %v27 = vld [vmem:[%s1 + $0x28] sm:$0xff]
    %v28 = vld [vmem:[%s1 + $0x30] sm:$0xff]
    %v29 = vld [vmem:[%s1 + $0x38] sm:$0xff]
    %v30 = vld [vmem:[%s1 + $0x40] sm:$0xff]
    %v31 = vld [vmem:[%s1 + $0x48] sm:$0xff]
    %v32 = vld [vmem:[%s1 + $0x50] sm:$0xff]
    %v33 = vld [vmem:[%s1 + $0x58] sm:$0xff]
    %v34 = vld [vmem:[%s1 + $0x60] sm:$0xff]
    %v35 = vld [vmem:[%s1 + $0x68] sm:$0xff]
    %v36 = vld [vmem:[%s1 + $0x70] sm:$0xff]
    %v37 = vld [vmem:[%s1 + $0x78] sm:$0xff]
    %v38 = vld [vmem:[%s2] sm:$0x1]
    %v39 = vld [vmem:[%s3] sm:$0xff]
    %v41 = vlaneseq
    %v42 = vshrl.u32 %v41, 7
    %v43 = vsub.s32 0, %v42
    %v44 = vrot.slane %v38, %v43
    %vm46 = vcmask 261120
    %v48 = vsel %vm46, %v21, 0
    %v51 = vsel %vm46, %v22, 0
    %v54 = vsel %vm46, %v23, 0
    %v57 = vsel %vm46, %v24, 0
    %v60 = vsel %vm46, %v25, 0
    %v63 = vsel %vm46, %v26, 0
    %v66 = vsel %vm46, %v27, 0
    %v69 = vsel %vm46, %v28, 0
    %v72 = vsel %vm46, %v29, 0
    %v75 = vsel %vm46, %v30, 0
    %v78 = vsel %vm46, %v31, 0
    %v81 = vsel %vm46, %v32, 0
    %v84 = vsel %vm46, %v33, 0
    %v87 = vsel %vm46, %v34, 0
    %v90 = vsel %vm46, %v35, 0
    %v93 = vsel %vm46, %v36, 0
    %v96 = vsel %vm46, %v37, 0
    %98 = vmatprep.subr.mxu0 0.0
    %99 = vmatpush1.xpose.msra.mxu0 %v51
    %100 = vmatprep.subr.mxu0 0.0
    %101 = vmatpush1.xpose.msra.mxu0 %v54
    %102 = vmatprep.subr.mxu0 0.0
    %103 = vmatpush1.xpose.msra.mxu0 %v57
    %104 = vmatprep.subr.mxu0 0.0
    %105 = vmatpush1.xpose.msra.mxu0 %v60
    %106 = vmatprep.subr.mxu0 0.0
    %107 = vmatpush1.xpose.msra.mxu0 %v63
    %108 = vmatprep.subr.mxu0 0.0
    %109 = vmatpush1.xpose.msra.mxu0 %v66
    %110 = vmatprep.subr.mxu0 0.0
    %111 = vmatpush1.xpose.msra.mxu0 %v69
    %112 = vmatprep.subr.mxu0 0.0
    %113 = vmatpush1.xpose.msra.mxu0 %v72
    %114 = vmatprep.subr.mxu0 0.0
    %115 = vmatpush1.xpose.msra.mxu0 %v75
    %116 = vmatprep.subr.mxu0 0.0
    %117 = vmatpush1.xpose.msra.mxu0 %v78
    %118 = vmatprep.subr.mxu0 0.0
    %119 = vmatpush1.xpose.msra.mxu0 %v81
    %120 = vmatprep.subr.mxu0 0.0
    %121 = vmatpush1.xpose.msra.mxu0 %v84
    %122 = vmatprep.subr.mxu0 0.0
    %123 = vmatpush1.xpose.msra.mxu0 %v87
    %124 = vmatprep.subr.mxu0 0.0
    %125 = vmatpush1.xpose.msra.mxu0 %v90
    %126 = vmatprep.subr.mxu0 0.0
    %127 = vmatpush1.xpose.msra.mxu0 %v93
    %128 = vmatprep.subr.mxu0 0.0
    %129 = vmatpush1.xpose.msra.mxu0 %v96
    %130 = vmatprep.subr.mxu0 0.0
    %131 = vmatpush1.xpose.msra.mxu0 0.0
    %132 = vmatprep.subr.mxu0 0.0
    %133 = vmatpush1.xpose.msra.mxu0 0.0
    %134 = vmatprep.subr.mxu0 0.0
    %135 = vmatpush1.xpose.msra.mxu0 0.0
    %136 = vmatprep.subr.mxu0 0.0
    %137 = vmatpush1.xpose.msra.mxu0 0.0
    %138 = vmatprep.subr.mxu0 0.0
    %139 = vmatpush1.xpose.msra.mxu0 0.0
    %140 = vmatprep.subr.mxu0 0.0
    %141 = vmatpush1.xpose.msra.mxu0 0.0
    %142 = vmatprep.subr.mxu0 0.0
    %143 = vmatpush1.xpose.msra.mxu0 0.0
    %144 = vmatprep.subr.mxu0 0.0
    %145 = vmatpush1.xpose.msra.mxu0 0.0
    %146 = vmatprep.subr.mxu0 0.0
    %147 = vmatpush1.xpose.msra.mxu0 0.0
    %148 = vmatprep.subr.mxu0 0.0
    %149 = vmatpush1.xpose.msra.mxu0 0.0
    %150 = vmatprep.subr.mxu0 0.0
    %151 = vmatpush1.xpose.msra.mxu0 0.0
    %152 = vmatprep.subr.mxu0 0.0
    %153 = vmatpush1.xpose.msra.mxu0 0.0
    %154 = vmatprep.subr.mxu0 0.0
    %155 = vmatpush1.xpose.msra.mxu0 0.0
    %156 = vmatprep.subr.mxu0 0.0
    %157 = vmatpush1.xpose.msra.mxu0 0.0
    %158 = vmatprep.subr.mxu0 0.0
    %159 = vmatpush1.xpose.msra.mxu0 0.0
    %160 = vmatprep.subr.mxu0 0.0
    %161 = vmatpush1.xpose.msra.mxu0 0.0
    %162 = vmatprep.mubr.f32.mxu0 0.0
    %163 = vmatmul.mubr.f32.gmra.mrb[0].mxu0 %v48
    %v164 = vpop.f32.mrb[0].mxu0
    %v165 = vadd.f32 %v44, %v164
    %v166 = vpop.f32.mrb[0].mxu0
    %167 = vdwg.mxu0
    %168 = vst [vmem:[#allocation2] sm:$0xff] %v165
    %s169 = smul.u32 0, 8
    %v170 = vlaneseq
    %v171 = vshrl.u32 %v170, 7
    %v172 = vstv %s169
    %v173 = vadd.s32 %v172, %v171
    %v174 = vlaneseq
    %v175 = vand.u32 %v174, 127
    %vm176 = vcmp.lt.s32.totalorder %v173, 8
    %vm177 = vcmp.lt.s32.totalorder %v175, 8
    %vm178 = vmand %vm176, %vm177
    %v179 = vmax.f32 %v165, 0.0
    %v180 = vmul.f32 %v165, %v39
    %v181 = vsub.f32 %v179, %v180
    %v182 = vand.u32 2147483647, %v165
    %v183 = vsub.f32 0.0, %v182
    %v184 = vmul.f32 %v183, 1.442695
    %v185 = vpow.pop %v184
    %v186 = vadd.f32 %v185, 1.0
    %v187 = vlog2.pop %v186
    %v188 = vmul.f32 %v187, 0.6931472
    %v189 = vmul.f32 -0.5, %v185
    %v190 = vadd.f32 %v189, 1.0
    %v191 = vmul.f32 %v190, %v185
    %v192 = vand.u32 2147483647, %v185
    %vm193 = vcmp.lt.f32.partialorder %v192, 0.0004427343
    %v194 = vsel %vm193, %v191, %v188
    %v195 = vadd.f32 %v181, %v194
    %v196 = vsel %vm178, %v195, 0.0
    %197 = vadd.xlane.f32.xlu0 %v196
    %v198 = vpop.xlane.xlu0 %197
    %v199 = vrot.slane %v198, 4
    %v200 = vadd.f32 %v198, %v199
    %v201 = vrot.slane %v200, 2
    %v202 = vadd.f32 %v200, %v201
    %v203 = vrot.slane %v202, 1
    %v204 = vadd.f32 %v202, %v203
    %s205 = vtos %v204
    %v206 = vstv %s205
    %207 = vst [vmem:[#allocation4] sm:$0xff] %v206
    // Predicated region
    $region18: #{tpu_custom_call.1} parent=1 // pred_check
      _
    $region19: #{tpu_custom_call.1} parent=1 // pred_check_branch
      %209 = sbr.rel (0) target = $region21
    $region20: #{tpu_custom_call.1} parent=1 // pred_region
      %s211 = ssub.s32 128, 128
      %212 = vsyncadd [#allocation3], %s211
      %s214 = sshll.u32 [#allocation2], 4
      %s215 = int_to_ptr.vmem [resolvable:$true] %s214
      %217 = dma.vmem_to_hbm [thread:$0]  %s215, 128, %s4, [#allocation3]
    $region21: #{tpu_custom_call.1} parent=1 // pred_fallthru
      _
    // Predicated region
    $region22: #{tpu_custom_call.1} parent=1 // pred_check
      _
    $region23: #{tpu_custom_call.1} parent=1 // pred_check_branch
      %219 = sbr.rel (0) target = $region25
    $region24: #{tpu_custom_call.1} parent=1 // pred_region
      %s221 = ssub.s32 128, 128
      %222 = vsyncadd [#allocation5], %s221
      %s224 = sshll.u32 [#allocation4], 4
      %s225 = int_to_ptr.vmem [resolvable:$true] %s224
      %227 = dma.vmem_to_hbm [thread:$0]  %s225, 128, %s5, [#allocation5]
    $region25: #{tpu_custom_call.1} parent=1 // pred_fallthru
      _
    // Predicated region
    $region26: #{tpu_custom_call.1} parent=1 // pred_check
      _
    $region27: #{tpu_custom_call.1} parent=1 // pred_check_branch
      %229 = sbr.rel (0) target = $region29
    $region28: #{tpu_custom_call.1} parent=1 // pred_region
      %230 = dma.done [#allocation3], 128
    $region29: #{tpu_custom_call.1} parent=1 // pred_fallthru
      _
    // Predicated region
    $region30: #{tpu_custom_call.1} parent=1 // pred_check
      _
    $region31: #{tpu_custom_call.1} parent=1 // pred_check_branch
      %232 = sbr.rel (0) target = $region33
    $region32: #{tpu_custom_call.1} parent=1 // pred_region
      %233 = dma.done [#allocation5], 128
    $region33: #{tpu_custom_call.1} parent=1 // pred_fallthru
      _
    %234 = vsyncpa [#allocation3], 1
    %235 = vsyncpa [#allocation5], 1

</llo_original>
